<compile_context>
chip_gen: v7x
topology: tpu7x:2x2x1
jax: 0.10.0
libtpu: 0.0.40
codegen_flags: <defaults>
</compile_context>

<pallas_src>
import functools
import re

import jax
import jax.numpy as jnp
from jax import lax
from jax.experimental import pallas as pl
from jax.experimental.pallas import tpu as pltpu


_PARTIAL_TILE = (8, 128)  # one int32 vreg of partial-count output per grid step


def _topk_hits_kernel(labels_ref, outputs_ref, partial_ref, *, k, n_valid,
                      block_rows, cast_to_f32):
    out = outputs_ref[...]                                        # (tN, C)
    if cast_to_f32:
        # v5-class chips have no bf16 VALU; everywhere else stay native so
        # HBM bytes, VMEM temporaries and VPU ops are half-width for bf16.
        out = out.astype(jnp.float32)
    labels = labels_ref[...]                                      # (tN, 1) i32

    # Logit at each row's label index via iota + select (no per-row gather).
    col_ids = lax.broadcasted_iota(jnp.int32, out.shape, 1)       # (tN, C)
    label_val = jnp.max(jnp.where(col_ids == labels, out, -jnp.inf),
                        axis=-1, keepdims=True)                   # (tN, 1)

    if k == 1:
        # Fast path: label is top-1 iff it equals the row max (second XLU
        # reduce; the XLU slot is otherwise idle in this kernel).
        hit = jnp.max(out, axis=-1, keepdims=True) <= label_val   # (tN, 1)
    else:
        # Rank of the label logit = #logits strictly greater than it.
        rank = jnp.sum(out > label_val, axis=-1, keepdims=True,
                       dtype=jnp.int32)                           # (tN, 1)
        hit = rank < k

    # Mask padded rows of the final (ragged) batch block.
    row_ids = (pl.program_id(0) * block_rows
               + lax.broadcasted_iota(jnp.int32, hit.shape, 0))
    hit = jnp.logical_and(hit, row_ids < n_valid)

    # Per-block partial count, splatted over a lane-dense (8, 128) tile so the
    # store is an unmasked vst and the write-back DMA is tile-aligned.
    count = jnp.sum(hit, dtype=jnp.int32)
    partial_ref[...] = jnp.broadcast_to(count, partial_ref.shape)


def _tpu_generation():
    try:
        kind = jax.local_devices()[0].device_kind
    except Exception:
        return None
    m = re.search(r"(\d+)", kind)
    return int(m.group(1)) if m else None


def _vmem_capacity_bytes(gen):
    # Conservative per-core VMEM capacity; hedge get_tpu_info() with the
    # generation-based value in case it reports per-chip numbers.
    if gen is None or gen >= 7:
        fallback = 64 << 20            # v7x (and unknown: assume smallest)
    elif gen >= 4:
        fallback = 128 << 20           # v4 / v5e / v6e
    else:
        fallback = 16 << 20
    try:
        info = int(pltpu.get_tpu_info().vmem_capacity_bytes)
        return min(info, fallback) if info > 0 else fallback
    except Exception:
        return fallback


def topk_error(labels, outputs, k=1, percent=True, *, block_rows=None):
    """JAX/Pallas equivalent of TopKError.forward. Returns a jnp f32 scalar."""
    outputs = jnp.asarray(outputs)
    labels = jnp.asarray(labels)

    # Equivalent of the torch .squeeze() calls, but safe for N == 1.
    n_classes = outputs.shape[-1]
    outputs = outputs.reshape(-1, n_classes)              # (N, C), native dtype
    labels = labels.reshape(-1).astype(jnp.int32)         # (N,)
    n = outputs.shape[0]
    labels_2d = labels.reshape(n, 1)

    gen = _tpu_generation()
    itemsize = jnp.dtype(outputs.dtype).itemsize
    # Keep the comparison chain in the native dtype on bf16-VALU chips (v6e+);
    # cast to f32 only on v5-and-older or for dtypes other than f32/bf16.
    cast_to_f32 = not (outputs.dtype == jnp.float32
                       or (outputs.dtype == jnp.bfloat16
                           and gen is not None and gen >= 6))
    compute_itemsize = 4 if cast_to_f32 else itemsize
    # Sublane tile height of the native dtype: 8 (4-byte), 16 (2-byte), 32 (1-byte).
    sublane = max(8, 32 // max(1, itemsize))

    # VMEM working-set bytes per (row, class) element:
    #   2 x native block (double buffer) + ~3 block-shaped compute temporaries
    #   (where() result, compare mask / row max, and the f32 copy when casting).
    vmem_cap = _vmem_capacity_bytes(gen)
    vmem_budget = (3 * vmem_cap) // 4          # ~48 MiB on v7x, ~96 MiB on v5e/v6e
    bytes_per_elem = 2 * itemsize + 3 * compute_itemsize
    rows_fit = (vmem_budget - (2 << 20)) // max(1, n_classes * bytes_per_elem)
    rows_cap = max(sublane, (rows_fit // sublane) * sublane)

    if block_rows is None:
        if n <= rows_cap:
            if gen is not None and gen >= 7 and n >= 2 * sublane:
                # v7x megacore: use >=2 grid steps so the "parallel" batch axis
                # can be sharded across both TensorCores.
                half = ((pl.cdiv(n, 2) + sublane - 1) // sublane) * sublane
                block_rows = min(rows_cap, half)
            else:
                block_rows = n        # single full block (always layout-legal)
        else:
            block_rows = rows_cap     # sublane multiple; ragged last block masked
    grid = pl.cdiv(n, block_rows)

    # Declared VMEM limit: the generation budget, bumped if even the minimum
    # block needs more (huge C), clamped below physical capacity.
    need = block_rows * n_classes * bytes_per_elem + (4 << 20)
    vmem_limit = int(min(vmem_cap - (4 << 20), max(vmem_budget, need)))

    # TODO(synk): for LM-vocab-scale C also tile the class axis (two-level grid
    # with the label logit gathered via scalar prefetch).
    # TODO(synk): NaN logits / out-of-range labels follow the tie-free
    # rank-counting semantics, not torch.topk's NaN-is-largest / index-error.

    cost = pl.CostEstimate(
        flops=6 * n * n_classes,
        transcendentals=0,
        bytes_accessed=(n * n_classes * itemsize + n * 4
                        + grid * _PARTIAL_TILE[0] * _PARTIAL_TILE[1] * 4))

    partials = pl.pallas_call(
        functools.partial(_topk_hits_kernel, k=int(k), n_valid=n,
                          block_rows=block_rows, cast_to_f32=cast_to_f32),
        out_shape=jax.ShapeDtypeStruct(
            (grid * _PARTIAL_TILE[0], _PARTIAL_TILE[1]), jnp.int32),
        grid=(grid,),
        in_specs=[
            pl.BlockSpec((block_rows, 1), lambda i: (i, 0)),
            pl.BlockSpec((block_rows, n_classes), lambda i: (i, 0)),
        ],
        out_specs=pl.BlockSpec(_PARTIAL_TILE, lambda i: (i, 0)),
        compiler_params=pltpu.CompilerParams(
            dimension_semantics=("parallel",),
            vmem_limit_bytes=vmem_limit,
        ),
        cost_estimate=cost,
    )(labels_2d, outputs)

    # One scalar per block lives at [block*8, :]; take one lane per block.
    hits = jnp.sum(partials[::_PARTIAL_TILE[0], 0]).astype(jnp.float32)
    acc = hits / jnp.float32(n)
    err = 1.0 - acc
    if percent:
        err = 100.0 * err
    return err  # no host sync here; caller decides when to block


def _ref_err(labels, outputs, k):
    # Pure-JAX reference (mirrors torch.topk for tie-free logits).
    topk_idx = jax.lax.top_k(outputs.astype(jnp.float32), k)[1]
    acc = jnp.mean(
        jnp.sum((labels[:, None] == topk_idx).astype(jnp.float32), axis=-1))
    return float(100.0 * (1.0 - acc))


if __name__ == "__main__":
    key = jax.random.PRNGKey(0)
    k_labels, k_logits, k_perm = jax.random.split(key, 3)

    # --- small f32 case: single full-batch block -----------------------------
    N, C = 8, 32
    outputs = jax.random.normal(k_logits, (N, C), dtype=jnp.float32)
    labels = jax.random.randint(k_labels, (N,), 0, C, dtype=jnp.int32)
    for kk in (1, 2):
        err = float(jax.block_until_ready(
            topk_error(labels, outputs, k=kk, percent=True)))
        want = _ref_err(labels, outputs, kk)
        assert abs(err - want) < 1e-4, ("f32", kk, err, want)

    # --- tiled + ragged-masked case (forces grid=3 with an 8-row block) ------
    N2, C2 = 20, 32
    out2 = jax.random.normal(jax.random.fold_in(k_logits, 1), (N2, C2),
                             dtype=jnp.float32)
    lab2 = jax.random.randint(jax.random.fold_in(k_labels, 1), (N2,), 0, C2,
                              dtype=jnp.int32)
    for kk in (1, 3):
        err = float(jax.block_until_ready(
            topk_error(lab2, out2, k=kk, percent=True, block_rows=8)))
        want = _ref_err(lab2, out2, kk)
        assert abs(err - want) < 1e-4, ("ragged", kk, err, want)

    # --- bf16 case (native-dtype compare path on v6e/v7x); tie-free by
    #     construction: each row is a permutation of exactly-representable ints.
    N3, C3 = 16, 128
    base = jnp.arange(C3, dtype=jnp.float32)
    out3 = jnp.stack([
        jax.random.permutation(jax.random.fold_in(k_perm, i), base)
        for i in range(N3)]).astype(jnp.bfloat16)
    lab3 = jax.random.randint(jax.random.fold_in(k_labels, 2), (N3,), 0, C3,
                              dtype=jnp.int32)
    for kk in (1, 4):
        err = float(jax.block_until_ready(
            topk_error(lab3, out3, k=kk, percent=True)))
        want = _ref_err(lab3, out3, kk)
        assert abs(err - want) < 1e-4, ("bf16", kk, err, want)

    print("KERNEL_OK")
</pallas_src>

<mosaic_0001>
module attributes {stable_mosaic.version = 11 : i64} {
  func.func @_topk_hits_kernel(%arg0: i32, %arg1: memref<8x1xi32, #tpu.memory_space<vmem>>, %arg2: memref<8x32xf32, #tpu.memory_space<vmem>>, %arg3: memref<8x128xi32, #tpu.memory_space<vmem>>) attributes {dimension_semantics = [#tpu.dimension_semantics<parallel>], iteration_bounds = array<i64: 1>, scalar_prefetch = 0 : i64, scratch_operands = 0 : i64, tpu.core_type = #tpu.core_type<tc>, window_params = [{transform_indices = @transform_0, window_bounds = array<i64: 8, 1>}, {transform_indices = @transform_1, window_bounds = array<i64: 8, 32>}, {transform_indices = @transform_2, window_bounds = array<i64: 8, 128>}]} {
    %c0 = arith.constant 0 : index
    %c0_0 = arith.constant 0 : index
    %0 = vector.load %arg2[%c0, %c0_0] : memref<8x32xf32, #tpu.memory_space<vmem>>, vector<8x32xf32>
    %c0_1 = arith.constant 0 : index
    %c0_2 = arith.constant 0 : index
    %1 = vector.load %arg1[%c0_1, %c0_2] : memref<8x1xi32, #tpu.memory_space<vmem>>, vector<8x1xi32>
    %2 = tpu.iota {dimensions = array<i32: 1>} : vector<8x32xi32>
    %3 = vector.broadcast %1 : vector<8x1xi32> to vector<8x32xi32>
    %4 = arith.cmpi eq, %2, %3 : vector<8x32xi32>
    %cst = arith.constant 0xFF800000 : f32
    %5 = vector.broadcast %cst : f32 to vector<8x32xf32>
    %6 = arith.select %4, %0, %5 : vector<8x32xi1>, vector<8x32xf32>
    %cst_3 = arith.constant dense<0xFF800000> : vector<8xf32>
    %7 = vector.multi_reduction <maximumf>, %6, %cst_3 [1] : vector<8x32xf32> to vector<8xf32>
    %8 = vector.shape_cast %7 : vector<8xf32> to vector<8x1xf32>
    %cst_4 = arith.constant dense<0xFF800000> : vector<8xf32>
    %9 = vector.multi_reduction <maximumf>, %0, %cst_4 [1] : vector<8x32xf32> to vector<8xf32>
    %10 = vector.shape_cast %9 : vector<8xf32> to vector<8x1xf32>
    %11 = arith.cmpf ole, %10, %8 : vector<8x1xf32>
    %c8_i32 = arith.constant 8 : i32
    %12 = arith.muli %arg0, %c8_i32 : i32
    %13 = tpu.iota {dimensions = array<i32: 0>} : vector<8x1xi32>
    %14 = vector.broadcast %12 : i32 to vector<8x1xi32>
    %15 = arith.addi %14, %13 : vector<8x1xi32>
    %c8_i32_5 = arith.constant 8 : i32
    %16 = vector.broadcast %c8_i32_5 : i32 to vector<8x1xi32>
    %17 = arith.cmpi slt, %15, %16 : vector<8x1xi32>
    %18 = arith.andi %11, %17 : vector<8x1xi1>
    %19 = arith.extui %18 : vector<8x1xi1> to vector<8x1xi32>
    %20 = vector.shape_cast %19 : vector<8x1xi32> to vector<1x8x1xi32>
    %cst_6 = arith.constant dense<0> : vector<1xi32>
    %21 = vector.multi_reduction <add>, %20, %cst_6 [1, 2] : vector<1x8x1xi32> to vector<1xi32>
    %22 = vector.shape_cast %21 : vector<1xi32> to vector<1x1x1xi32>
    %23 = vector.extract %22[0, 0, 0] : i32 from vector<1x1x1xi32>
    %24 = vector.broadcast %23 : i32 to vector<8x128xi32>
    %c0_7 = arith.constant 0 : index
    %c0_8 = arith.constant 0 : index
    %25 = vector.load %arg3[%c0_7, %c0_8] : memref<8x128xi32, #tpu.memory_space<vmem>>, vector<8x128xi32>
    tpu.vector_store %arg3[%c0_7, %c0_8], %24 {strides = array<i32>} : memref<8x128xi32, #tpu.memory_space<vmem>>, vector<8x128xi32>,
    return
  }
  func.func @transform_0(%arg0: i32) -> (i32, i32) {
    %c0_i32 = arith.constant 0 : i32
    %c0_i32_0 = arith.constant 0 : i32
    return %arg0, %c0_i32 : i32, i32
  }
  func.func @transform_1(%arg0: i32) -> (i32, i32) {
    %c0_i32 = arith.constant 0 : i32
    %c0_i32_0 = arith.constant 0 : i32
    return %arg0, %c0_i32 : i32, i32
  }
  func.func @transform_2(%arg0: i32) -> (i32, i32) {
    %c0_i32 = arith.constant 0 : i32
    %c0_i32_0 = arith.constant 0 : i32
    return %arg0, %c0_i32 : i32, i32
  }
}

</mosaic_0001>

<llo_original>
// kernel: tpu_custom_call.1
$region0: #{tpu_custom_call.1}
  #allocation0 [shape = 'u32[]', space=smem, size = 0x4, offset = 0x4, fixed_abs, tag = 'smem constant byte address 0x4 - core index']
  #allocation1 [shape = 'u32[144,128]{1,0:T(1,128)}', space=vmem, size = 0x12000, scoped, tag = 'internal scratch']
  %s0 = inlined_call_operand.vmem [shape: s32[8,1], index: 0, kind: input, shape index: {}]
  %s1 = inlined_call_operand.vmem [shape: f32[8,32], index: 1, kind: input, shape index: {}]
  %s2 = inlined_call_operand.hbm [shape: s32[8,128], index: 2, kind: output, shape index: {}]
  %s3 = sld [smem:[#allocation0]]
  $region18: #{tpu_custom_call.1} parent=0
    _
  %s5 = ssub.s32 1, %s3
  %s6 = scalar_select 0, %s5, %s3
  $region1: #{tpu_custom_call.1} parent=0
    #allocation2 [shape = 'u8[4096]{0}', space=vmem, size = 0x1000, scoped, tag = 'output window, operand 0, single buffered']
    #allocation3 [shape = 's32[1]{0}', space=sflag, size = 0x4, scoped, tag = 'scoped memory for tpu_custom_call.1']
    %7 = vsyncpa [#allocation3], 0
    // Predicated region
    $region2: #{tpu_custom_call.1} parent=1 // pred_check
      _
    $region3: #{tpu_custom_call.1} parent=1 // pred_check_branch
      %9 = sbr.rel (0) target = $region5
    $region4: #{tpu_custom_call.1} parent=1 // pred_region
      _
    $region5: #{tpu_custom_call.1} parent=1 // pred_fallthru
      _
    // Predicated region
    $region6: #{tpu_custom_call.1} parent=1 // pred_check
      _
    $region7: #{tpu_custom_call.1} parent=1 // pred_check_branch
      %11 = sbr.rel (0) target = $region9
    $region8: #{tpu_custom_call.1} parent=1 // pred_region
      _
    $region9: #{tpu_custom_call.1} parent=1 // pred_fallthru
      _
    %v12 = vld [vmem:[%s1] sm:$0xff]
    %v13 = vld [vmem:[%s0] sm:$0xff]
    %v14 = vlaneseq
    %v15 = vand.u32 %v14, 127
    %16 = vset.pattern.permute.xlu0 0
    %17 = vperm.xlu0 %16, %v13
    %v18 = vpop.permute.xlu0 %17
    %vm19 = vcmp.eq.s32.totalorder %v15, %v18
    %v20 = vsel %vm19, %v12, -inf
    %vm21 = vcmask 261120
    %v22 = vsel %vm21, %v20, -inf
    %23 = vmax.xlane.f32.xlu0 %v22
    %v24 = vpop.xlane.xlu0 %23
    %v25 = vsel %vm21, %v12, -inf
    %26 = vmax.xlane.f32.xlu0 %v25
    %v27 = vpop.xlane.xlu0 %26
    %vm28 = vcmp.le.f32.partialorder %v27, %v24
    %s29 = smul.u32 0, 8
    %v30 = vlaneseq
    %v31 = vshrl.u32 %v30, 7
    %v32 = vstv %s29
    %v33 = vadd.s32 %v32, %v31
    %vm34 = vcmp.lt.s32.totalorder %v33, 8
    %vm35 = vmand %vm28, %vm34
    %v36 = vsel %vm35, 1, 0
    %v37 = vrot.slane %v36, 4
    %v38 = vadd.s32 %v36, %v37
    %v39 = vrot.slane %v38, 2
    %v40 = vadd.s32 %v38, %v39
    %v41 = vrot.slane %v40, 1
    %v42 = vadd.s32 %v40, %v41
    %s43 = vtos %v42
    %v44 = vstv %s43
    %45 = vst [vmem:[#allocation2] sm:$0xff] %v44
    // Predicated region
    $region10: #{tpu_custom_call.1} parent=1 // pred_check
      _
    $region11: #{tpu_custom_call.1} parent=1 // pred_check_branch
      %47 = sbr.rel (0) target = $region13
    $region12: #{tpu_custom_call.1} parent=1 // pred_region
      %s49 = ssub.s32 128, 128
      %50 = vsyncadd [#allocation3], %s49
      %s52 = sshll.u32 [#allocation2], 4
      %s53 = int_to_ptr.vmem [resolvable:$true] %s52
      %55 = dma.vmem_to_hbm [thread:$0]  %s53, 128, %s2, [#allocation3]
    $region13: #{tpu_custom_call.1} parent=1 // pred_fallthru
      _
    // Predicated region
    $region14: #{tpu_custom_call.1} parent=1 // pred_check
      _
    $region15: #{tpu_custom_call.1} parent=1 // pred_check_branch
      %57 = sbr.rel (0) target = $region17
    $region16: #{tpu_custom_call.1} parent=1 // pred_region
      %58 = dma.done [#allocation3], 128
    $region17: #{tpu_custom_call.1} parent=1 // pred_fallthru
      _
    %59 = vsyncpa [#allocation3], 1

</llo_original>
